<compile_context>
chip_gen: v7x
topology: tpu7x:2x2x1
jax: 0.10.0
libtpu: 0.0.40
codegen_flags: <defaults>
</compile_context>

<pallas_src>
import functools

import jax
import jax.numpy as jnp
from jax import lax
from jax.experimental import pallas as pl
from jax.experimental.pallas import tpu as pltpu

EPS = 1e-5          # nn.BatchNorm1d default eps
NEG_SLOPE = 0.2     # nn.LeakyReLU(0.2)
HIDDEN = 4          # hidden width fixed by the module definition


def _slab_layout(input_dim, output_dim):
    """Row offsets of the single fused parameter slab."""
    row_w1 = 0                                    # rows [0, 4): w1 (4, input_dim)
    row_bn = HIDDEN                               # rows [4, 4+12): [gamma | beta] cols
    row_w2 = row_bn + 2 * HIDDEN + output_dim     # 4 tiles of (4, B): w2 columns
    row_w3 = row_w2 + HIDDEN * HIDDEN             # 4 tiles of (out, B): w3 columns
    rows = row_w3 + HIDDEN * output_dim
    return row_w1, row_bn, row_w2, row_w3, rows


def _leaky_relu(x):
    # max(x, 0.2*x): one mul + one max (identical to where(x>=0, x, 0.2x)).
    return jnp.maximum(x, NEG_SLOPE * x)


def _mcr_disc_kernel(x_ref, slab_ref, o_ref, *, input_dim, output_dim, batch):
    H = HIDDEN
    inv_b = 1.0 / batch
    row_w1, row_bn, row_w2, row_w3, _ = _slab_layout(input_dim, output_dim)

    def bn_train(h, layer_off, n):
        """Training-mode BatchNorm1d on (features, batch), one-pass stats."""
        g = slab_ref[row_bn + layer_off: row_bn + layer_off + n, 0:1]   # (n,1)
        b = slab_ref[row_bn + layer_off: row_bn + layer_off + n, 1:2]   # (n,1)
        s1 = jnp.sum(h, axis=1, keepdims=True)          # independent lane reduces
        s2 = jnp.sum(h * h, axis=1, keepdims=True)
        mean = s1 * inv_b
        var = s2 * inv_b - mean * mean                  # biased variance
        s = g * lax.rsqrt(var + EPS)                    # (n,1)
        t = b - mean * s                                # (n,1)
        return h * s + t                                # lane-dense scale+shift

    def small_matmul(h, row0, n_out):
        """(n_out, 4) @ (4, B) as 4 VPU multiply-adds.

        Weight columns arrive pre-broadcast over the batch (lane) axis inside
        the slab, so there is no lane-select / lane-broadcast through the XLU
        on the serial per-layer chain; only the cheap sublane broadcast of
        h[k:k+1, :] remains.
        """
        acc = slab_ref[row0: row0 + n_out, 0:batch] * h[0:1, :]
        for k in range(1, H):                           # static unroll, K == 4
            w_k = slab_ref[row0 + k * n_out: row0 + (k + 1) * n_out, 0:batch]
            acc = acc + w_k * h[k: k + 1, :]
        return acc

    x = x_ref[...]                                      # (B, input_dim), native layout
    w1 = slab_ref[row_w1: row_w1 + H, 0:input_dim]      # (4, input_dim)

    # l1: Linear(input_dim, 4) -> BN(4) -> LeakyReLU(0.2).
    # Contract the LAST dims of both operands: the (4, B) lane-dense
    # intermediate is produced without any wrapper-side transpose of x.
    # (Linear biases dropped: exactly cancelled by the BN mean subtraction.)
    h1 = lax.dot_general(w1, x, (((1,), (1,)), ((), ())),
                         preferred_element_type=jnp.float32)        # (4, B), MXU
    h1 = _leaky_relu(bn_train(h1, 0, H))

    # l2: Linear(4, 4) -> BN(4) -> LeakyReLU(0.2)   (K = 4 -> VPU FMAs)
    h2 = _leaky_relu(bn_train(small_matmul(h1, row_w2, H), H, H))

    # l3: Linear(4, output_dim) -> BN(output_dim), no activation
    h3 = bn_train(small_matmul(h2, row_w3, output_dim), 2 * H, output_dim)  # (out, B)

    # Emit (B, output_dim) directly (no wrapper transpose): out = eye(B) @ h3^T
    # through the same contracted-last-dims dot_general form used for layer 1.
    iota_r = lax.broadcasted_iota(jnp.int32, (batch, batch), 0)
    iota_c = lax.broadcasted_iota(jnp.int32, (batch, batch), 1)
    eye = jnp.where(iota_r == iota_c, 1.0, 0.0).astype(jnp.float32)
    o_ref[...] = lax.dot_general(eye, h3, (((1,), (1,)), ((), ())),
                                 preferred_element_type=jnp.float32)  # (B, out)


def mcr_discriminator(x, slab, output_dim):
    """x: (B, input_dim) f32, native layout. Returns (B, output_dim) f32
    (training-mode forward). Exactly two input DMAs: x and the fused slab."""
    B, input_dim = x.shape
    kernel = functools.partial(
        _mcr_disc_kernel, input_dim=input_dim, output_dim=output_dim, batch=B
    )
    vmem = pl.BlockSpec(memory_space=pltpu.MemorySpace.VMEM)

    return pl.pallas_call(
        kernel,
        out_shape=jax.ShapeDtypeStruct((B, output_dim), jnp.float32),
        in_specs=[vmem, vmem],
        out_specs=vmem,
    )(x, slab)


# ----------------------------------------------------------------------------
# Parameter construction / packing
# ----------------------------------------------------------------------------

def init_params(key, input_dim, output_dim):
    """Weights in native PyTorch (out, in) layout.  Linear biases omitted
    (a forward no-op under training-mode BatchNorm).  BN gamma/beta are given
    non-trivial values so the packed affine path is actually exercised."""
    ks = jax.random.split(key, 9)

    def linear_w(k, fan_in, fan_out):
        bound = 1.0 / jnp.sqrt(fan_in)
        return jax.random.uniform(k, (fan_out, fan_in), jnp.float32, -bound, bound)

    def gamma(k, n):
        return jax.random.uniform(k, (n,), jnp.float32, 0.5, 1.5)

    def beta(k, n):
        return 0.1 * jax.random.normal(k, (n,), jnp.float32)

    return dict(
        w1=linear_w(ks[0], input_dim, HIDDEN),
        w2=linear_w(ks[1], HIDDEN, HIDDEN),
        w3=linear_w(ks[2], HIDDEN, output_dim),
        g1=gamma(ks[3], HIDDEN), be1=beta(ks[4], HIDDEN),
        g2=gamma(ks[5], HIDDEN), be2=beta(ks[6], HIDDEN),
        g3=gamma(ks[7], output_dim), be3=beta(ks[8], output_dim),
    )


def pack_params(p, batch):
    """Pack every parameter into ONE slab (single DMA).

    Rows:   [0,4)        w1 (4, input_dim)
            [4,16)       columns 0/1 = concatenated gamma / beta (12 features)
            [16,32)      w2 columns, each pre-broadcast to (4, batch)
            [32,32+4*od) w3 columns, each pre-broadcast to (out_dim, batch)
    """
    input_dim = p["w1"].shape[1]
    output_dim = p["w3"].shape[0]
    H = HIDDEN
    row_w1, row_bn, row_w2, row_w3, rows = _slab_layout(input_dim, output_dim)
    cols = max(batch, input_dim, 2)

    slab = jnp.zeros((rows, cols), jnp.float32)
    slab = slab.at[row_w1:row_w1 + H, 0:input_dim].set(p["w1"])

    gamma = jnp.concatenate([p["g1"], p["g2"], p["g3"]])
    beta = jnp.concatenate([p["be1"], p["be2"], p["be3"]])
    slab = slab.at[row_bn:row_bn + 2 * H + output_dim, 0].set(gamma)
    slab = slab.at[row_bn:row_bn + 2 * H + output_dim, 1].set(beta)

    for k in range(H):
        slab = slab.at[row_w2 + k * H: row_w2 + (k + 1) * H, 0:batch].set(
            jnp.broadcast_to(p["w2"][:, k:k + 1], (H, batch)))
        slab = slab.at[row_w3 + k * output_dim: row_w3 + (k + 1) * output_dim,
                       0:batch].set(
            jnp.broadcast_to(p["w3"][:, k:k + 1], (output_dim, batch)))
    return slab


# ----------------------------------------------------------------------------
# Pure-JAX reference (centered two-pass BN, HIGHEST-precision dots)
# ----------------------------------------------------------------------------

def reference_forward(x, p):
    def bn(h, g, b):
        m = h.mean(axis=0, keepdims=True)
        v = ((h - m) ** 2).mean(axis=0, keepdims=True)
        return (h - m) * jax.lax.rsqrt(v + EPS) * g + b

    def lrelu(h):
        return jnp.where(h >= 0, h, NEG_SLOPE * h)

    hp = jax.lax.Precision.HIGHEST
    h1 = lrelu(bn(jnp.dot(x, p["w1"].T, precision=hp), p["g1"], p["be1"]))
    h2 = lrelu(bn(jnp.dot(h1, p["w2"].T, precision=hp), p["g2"], p["be2"]))
    return bn(jnp.dot(h2, p["w3"].T, precision=hp), p["g3"], p["be3"])


if __name__ == "__main__":
    key = jax.random.PRNGKey(0)
    k_x, k_p = jax.random.split(key)

    batch = 128          # batch on lanes -> lane-dense elementwise work
    input_dim = 16
    output_dim = 4

    x = jax.random.normal(k_x, (batch, input_dim), jnp.float32)
    params = init_params(k_p, input_dim, output_dim)
    slab = pack_params(params, batch)

    out = mcr_discriminator(x, slab, output_dim)
    out = jax.block_until_ready(out)

    assert out.shape == (batch, output_dim)
    assert out.dtype == jnp.float32

    ref = jax.block_until_ready(reference_forward(x, params))
    assert jnp.allclose(out, ref, atol=1e-4, rtol=1e-4), (
        float(jnp.max(jnp.abs(out - ref)))
    )

    print("KERNEL_OK")
</pallas_src>

<mosaic_0001>
module attributes {stable_mosaic.version = 11 : i64} {
  func.func @_mcr_disc_kernel(%arg0: memref<128x16xf32, #tpu.memory_space<vmem>>, %arg1: memref<48x128xf32, #tpu.memory_space<vmem>>, %arg2: memref<128x4xf32, #tpu.memory_space<vmem>>) attributes {dimension_semantics = [], scalar_prefetch = 0 : i64, scratch_operands = 0 : i64, tpu.core_type = #tpu.core_type<tc>} {
    %c0 = arith.constant 0 : index
    %c0_0 = arith.constant 0 : index
    %0 = vector.load %arg0[%c0, %c0_0] : memref<128x16xf32, #tpu.memory_space<vmem>>, vector<128x16xf32>
    %c0_1 = arith.constant 0 : index
    %c0_2 = arith.constant 0 : index
    %1 = vector.load %arg1[%c0_1, %c0_2] : memref<48x128xf32, #tpu.memory_space<vmem>>, vector<4x16xf32>
    %cst = arith.constant dense<0.000000e+00> : vector<4x128xf32>
    %2 = tpu.matmul %1, %0, %cst {dimension_numbers = #tpu.dot_dimension_numbers<[1], [1], [0], [0], [0, 0, 1, 0], [], []>} : vector<4x16xf32>, vector<128x16xf32>, vector<4x128xf32> -> vector<4x128xf32>
    %c4 = arith.constant 4 : index
    %c0_3 = arith.constant 0 : index
    %3 = vector.load %arg1[%c4, %c0_3] : memref<48x128xf32, #tpu.memory_space<vmem>>, vector<4x1xf32>
    %c4_4 = arith.constant 4 : index
    %c1 = arith.constant 1 : index
    %4 = vector.load %arg1[%c4_4, %c1] : memref<48x128xf32, #tpu.memory_space<vmem>>, vector<4x1xf32>
    %cst_5 = arith.constant dense<0.000000e+00> : vector<4xf32>
    %5 = vector.multi_reduction <add>, %2, %cst_5 [1] : vector<4x128xf32> to vector<4xf32>
    %6 = vector.shape_cast %5 : vector<4xf32> to vector<4x1xf32>
    %7 = arith.mulf %2, %2 : vector<4x128xf32>
    %cst_6 = arith.constant dense<0.000000e+00> : vector<4xf32>
    %8 = vector.multi_reduction <add>, %7, %cst_6 [1] : vector<4x128xf32> to vector<4xf32>
    %9 = vector.shape_cast %8 : vector<4xf32> to vector<4x1xf32>
    %cst_7 = arith.constant 7.812500e-03 : f32
    %10 = vector.broadcast %cst_7 : f32 to vector<4x1xf32>
    %11 = arith.mulf %6, %10 : vector<4x1xf32>
    %cst_8 = arith.constant 7.812500e-03 : f32
    %12 = vector.broadcast %cst_8 : f32 to vector<4x1xf32>
    %13 = arith.mulf %9, %12 : vector<4x1xf32>
    %14 = arith.mulf %11, %11 : vector<4x1xf32>
    %15 = arith.subf %13, %14 : vector<4x1xf32>
    %cst_9 = arith.constant 9.99999974E-6 : f32
    %16 = vector.broadcast %cst_9 : f32 to vector<4x1xf32>
    %17 = arith.addf %15, %16 : vector<4x1xf32>
    %18 = math.rsqrt %17 : vector<4x1xf32>
    %19 = arith.mulf %3, %18 : vector<4x1xf32>
    %20 = arith.mulf %11, %19 : vector<4x1xf32>
    %21 = arith.subf %4, %20 : vector<4x1xf32>
    %22 = vector.broadcast %19 : vector<4x1xf32> to vector<4x128xf32>
    %23 = arith.mulf %2, %22 : vector<4x128xf32>
    %24 = vector.broadcast %21 : vector<4x1xf32> to vector<4x128xf32>
    %25 = arith.addf %23, %24 : vector<4x128xf32>
    %cst_10 = arith.constant 2.000000e-01 : f32
    %26 = vector.broadcast %cst_10 : f32 to vector<4x128xf32>
    %27 = arith.mulf %26, %25 : vector<4x128xf32>
    %28 = arith.maximumf %25, %27 : vector<4x128xf32>
    %c16 = arith.constant 16 : index
    %c0_11 = arith.constant 0 : index
    %29 = vector.load %arg1[%c16, %c0_11] : memref<48x128xf32, #tpu.memory_space<vmem>>, vector<4x128xf32>
    %30 = vector.extract_strided_slice %28 {offsets = [0, 0], sizes = [1, 128], strides = [1, 1]} : vector<4x128xf32> to vector<1x128xf32>
    %31 = vector.broadcast %30 : vector<1x128xf32> to vector<4x128xf32>
    %32 = arith.mulf %29, %31 : vector<4x128xf32>
    %c20 = arith.constant 20 : index
    %c0_12 = arith.constant 0 : index
    %33 = vector.load %arg1[%c20, %c0_12] : memref<48x128xf32, #tpu.memory_space<vmem>>, vector<4x128xf32>
    %34 = vector.extract_strided_slice %28 {offsets = [1, 0], sizes = [1, 128], strides = [1, 1]} : vector<4x128xf32> to vector<1x128xf32>
    %35 = vector.broadcast %34 : vector<1x128xf32> to vector<4x128xf32>
    %36 = arith.mulf %33, %35 : vector<4x128xf32>
    %37 = arith.addf %32, %36 : vector<4x128xf32>
    %c24 = arith.constant 24 : index
    %c0_13 = arith.constant 0 : index
    %38 = vector.load %arg1[%c24, %c0_13] : memref<48x128xf32, #tpu.memory_space<vmem>>, vector<4x128xf32>
    %39 = vector.extract_strided_slice %28 {offsets = [2, 0], sizes = [1, 128], strides = [1, 1]} : vector<4x128xf32> to vector<1x128xf32>
    %40 = vector.broadcast %39 : vector<1x128xf32> to vector<4x128xf32>
    %41 = arith.mulf %38, %40 : vector<4x128xf32>
    %42 = arith.addf %37, %41 : vector<4x128xf32>
    %c28 = arith.constant 28 : index
    %c0_14 = arith.constant 0 : index
    %43 = vector.load %arg1[%c28, %c0_14] : memref<48x128xf32, #tpu.memory_space<vmem>>, vector<4x128xf32>
    %44 = vector.extract_strided_slice %28 {offsets = [3, 0], sizes = [1, 128], strides = [1, 1]} : vector<4x128xf32> to vector<1x128xf32>
    %45 = vector.broadcast %44 : vector<1x128xf32> to vector<4x128xf32>
    %46 = arith.mulf %43, %45 : vector<4x128xf32>
    %47 = arith.addf %42, %46 : vector<4x128xf32>
    %c8 = arith.constant 8 : index
    %c0_15 = arith.constant 0 : index
    %48 = vector.load %arg1[%c8, %c0_15] : memref<48x128xf32, #tpu.memory_space<vmem>>, vector<4x1xf32>
    %c8_16 = arith.constant 8 : index
    %c1_17 = arith.constant 1 : index
    %49 = vector.load %arg1[%c8_16, %c1_17] : memref<48x128xf32, #tpu.memory_space<vmem>>, vector<4x1xf32>
    %cst_18 = arith.constant dense<0.000000e+00> : vector<4xf32>
    %50 = vector.multi_reduction <add>, %47, %cst_18 [1] : vector<4x128xf32> to vector<4xf32>
    %51 = vector.shape_cast %50 : vector<4xf32> to vector<4x1xf32>
    %52 = arith.mulf %47, %47 : vector<4x128xf32>
    %cst_19 = arith.constant dense<0.000000e+00> : vector<4xf32>
    %53 = vector.multi_reduction <add>, %52, %cst_19 [1] : vector<4x128xf32> to vector<4xf32>
    %54 = vector.shape_cast %53 : vector<4xf32> to vector<4x1xf32>
    %cst_20 = arith.constant 7.812500e-03 : f32
    %55 = vector.broadcast %cst_20 : f32 to vector<4x1xf32>
    %56 = arith.mulf %51, %55 : vector<4x1xf32>
    %cst_21 = arith.constant 7.812500e-03 : f32
    %57 = vector.broadcast %cst_21 : f32 to vector<4x1xf32>
    %58 = arith.mulf %54, %57 : vector<4x1xf32>
    %59 = arith.mulf %56, %56 : vector<4x1xf32>
    %60 = arith.subf %58, %59 : vector<4x1xf32>
    %cst_22 = arith.constant 9.99999974E-6 : f32
    %61 = vector.broadcast %cst_22 : f32 to vector<4x1xf32>
    %62 = arith.addf %60, %61 : vector<4x1xf32>
    %63 = math.rsqrt %62 : vector<4x1xf32>
    %64 = arith.mulf %48, %63 : vector<4x1xf32>
    %65 = arith.mulf %56, %64 : vector<4x1xf32>
    %66 = arith.subf %49, %65 : vector<4x1xf32>
    %67 = vector.broadcast %64 : vector<4x1xf32> to vector<4x128xf32>
    %68 = arith.mulf %47, %67 : vector<4x128xf32>
    %69 = vector.broadcast %66 : vector<4x1xf32> to vector<4x128xf32>
    %70 = arith.addf %68, %69 : vector<4x128xf32>
    %cst_23 = arith.constant 2.000000e-01 : f32
    %71 = vector.broadcast %cst_23 : f32 to vector<4x128xf32>
    %72 = arith.mulf %71, %70 : vector<4x128xf32>
    %73 = arith.maximumf %70, %72 : vector<4x128xf32>
    %c32 = arith.constant 32 : index
    %c0_24 = arith.constant 0 : index
    %74 = vector.load %arg1[%c32, %c0_24] : memref<48x128xf32, #tpu.memory_space<vmem>>, vector<4x128xf32>
    %75 = vector.extract_strided_slice %73 {offsets = [0, 0], sizes = [1, 128], strides = [1, 1]} : vector<4x128xf32> to vector<1x128xf32>
    %76 = vector.broadcast %75 : vector<1x128xf32> to vector<4x128xf32>
    %77 = arith.mulf %74, %76 : vector<4x128xf32>
    %c36 = arith.constant 36 : index
    %c0_25 = arith.constant 0 : index
    %78 = vector.load %arg1[%c36, %c0_25] : memref<48x128xf32, #tpu.memory_space<vmem>>, vector<4x128xf32>
    %79 = vector.extract_strided_slice %73 {offsets = [1, 0], sizes = [1, 128], strides = [1, 1]} : vector<4x128xf32> to vector<1x128xf32>
    %80 = vector.broadcast %79 : vector<1x128xf32> to vector<4x128xf32>
    %81 = arith.mulf %78, %80 : vector<4x128xf32>
    %82 = arith.addf %77, %81 : vector<4x128xf32>
    %c40 = arith.constant 40 : index
    %c0_26 = arith.constant 0 : index
    %83 = vector.load %arg1[%c40, %c0_26] : memref<48x128xf32, #tpu.memory_space<vmem>>, vector<4x128xf32>
    %84 = vector.extract_strided_slice %73 {offsets = [2, 0], sizes = [1, 128], strides = [1, 1]} : vector<4x128xf32> to vector<1x128xf32>
    %85 = vector.broadcast %84 : vector<1x128xf32> to vector<4x128xf32>
    %86 = arith.mulf %83, %85 : vector<4x128xf32>
    %87 = arith.addf %82, %86 : vector<4x128xf32>
    %c44 = arith.constant 44 : index
    %c0_27 = arith.constant 0 : index
    %88 = vector.load %arg1[%c44, %c0_27] : memref<48x128xf32, #tpu.memory_space<vmem>>, vector<4x128xf32>
    %89 = vector.extract_strided_slice %73 {offsets = [3, 0], sizes = [1, 128], strides = [1, 1]} : vector<4x128xf32> to vector<1x128xf32>
    %90 = vector.broadcast %89 : vector<1x128xf32> to vector<4x128xf32>
    %91 = arith.mulf %88, %90 : vector<4x128xf32>
    %92 = arith.addf %87, %91 : vector<4x128xf32>
    %c12 = arith.constant 12 : index
    %c0_28 = arith.constant 0 : index
    %93 = vector.load %arg1[%c12, %c0_28] : memref<48x128xf32, #tpu.memory_space<vmem>>, vector<4x1xf32>
    %c12_29 = arith.constant 12 : index
    %c1_30 = arith.constant 1 : index
    %94 = vector.load %arg1[%c12_29, %c1_30] : memref<48x128xf32, #tpu.memory_space<vmem>>, vector<4x1xf32>
    %cst_31 = arith.constant dense<0.000000e+00> : vector<4xf32>
    %95 = vector.multi_reduction <add>, %92, %cst_31 [1] : vector<4x128xf32> to vector<4xf32>
    %96 = vector.shape_cast %95 : vector<4xf32> to vector<4x1xf32>
    %97 = arith.mulf %92, %92 : vector<4x128xf32>
    %cst_32 = arith.constant dense<0.000000e+00> : vector<4xf32>
    %98 = vector.multi_reduction <add>, %97, %cst_32 [1] : vector<4x128xf32> to vector<4xf32>
    %99 = vector.shape_cast %98 : vector<4xf32> to vector<4x1xf32>
    %cst_33 = arith.constant 7.812500e-03 : f32
    %100 = vector.broadcast %cst_33 : f32 to vector<4x1xf32>
    %101 = arith.mulf %96, %100 : vector<4x1xf32>
    %cst_34 = arith.constant 7.812500e-03 : f32
    %102 = vector.broadcast %cst_34 : f32 to vector<4x1xf32>
    %103 = arith.mulf %99, %102 : vector<4x1xf32>
    %104 = arith.mulf %101, %101 : vector<4x1xf32>
    %105 = arith.subf %103, %104 : vector<4x1xf32>
    %cst_35 = arith.constant 9.99999974E-6 : f32
    %106 = vector.broadcast %cst_35 : f32 to vector<4x1xf32>
    %107 = arith.addf %105, %106 : vector<4x1xf32>
    %108 = math.rsqrt %107 : vector<4x1xf32>
    %109 = arith.mulf %93, %108 : vector<4x1xf32>
    %110 = arith.mulf %101, %109 : vector<4x1xf32>
    %111 = arith.subf %94, %110 : vector<4x1xf32>
    %112 = vector.broadcast %109 : vector<4x1xf32> to vector<4x128xf32>
    %113 = arith.mulf %92, %112 : vector<4x128xf32>
    %114 = vector.broadcast %111 : vector<4x1xf32> to vector<4x128xf32>
    %115 = arith.addf %113, %114 : vector<4x128xf32>
    %116 = tpu.iota {dimensions = array<i32: 0>} : vector<128x128xi32>
    %117 = tpu.iota {dimensions = array<i32: 1>} : vector<128x128xi32>
    %118 = arith.cmpi eq, %116, %117 : vector<128x128xi32>
    %cst_36 = arith.constant 1.000000e+00 : f32
    %cst_37 = arith.constant 0.000000e+00 : f32
    %119 = vector.broadcast %cst_36 : f32 to vector<128x128xf32>
    %120 = vector.broadcast %cst_37 : f32 to vector<128x128xf32>
    %121 = arith.select %118, %119, %120 : vector<128x128xi1>, vector<128x128xf32>
    %cst_38 = arith.constant dense<0.000000e+00> : vector<128x4xf32>
    %122 = tpu.matmul %121, %115, %cst_38 {dimension_numbers = #tpu.dot_dimension_numbers<[1], [1], [0], [0], [0, 0, 1, 0], [], []>} : vector<128x128xf32>, vector<4x128xf32>, vector<128x4xf32> -> vector<128x4xf32>
    %c0_39 = arith.constant 0 : index
    %c0_40 = arith.constant 0 : index
    %123 = vector.load %arg2[%c0_39, %c0_40] : memref<128x4xf32, #tpu.memory_space<vmem>>, vector<128x4xf32>
    tpu.vector_store %arg2[%c0_39, %c0_40], %122 {strides = array<i32>} : memref<128x4xf32, #tpu.memory_space<vmem>>, vector<128x4xf32>,
    return
  }
}

</mosaic_0001>

<llo_original>
// kernel: tpu_custom_call.1
$region0: #{tpu_custom_call.1}
  #allocation0 [shape = 'u32[]', space=smem, size = 0x4, offset = 0x4, fixed_abs, tag = 'smem constant byte address 0x4 - core index']
  #allocation1 [shape = 'u32[144,128]{1,0:T(1,128)}', space=vmem, size = 0x12000, scoped, tag = 'internal scratch']
  %s0 = inlined_call_operand.vmem [shape: f32[128,16], index: 0, kind: input, shape index: {}]
  %s1 = inlined_call_operand.vmem [shape: f32[48,128], index: 1, kind: input, shape index: {}]
  %s2 = inlined_call_operand.vmem [shape: f32[128,4], index: 2, kind: output, shape index: {}]
  %s3 = sld [smem:[#allocation0]]
  $region18: #{tpu_custom_call.1} parent=0
    _
  %s5 = ssub.s32 1, %s3
  %s6 = scalar_select 0, %s5, %s3
  // Predicated region
  $region2: #{tpu_custom_call.1} parent=0 // pred_check
    _
  $region3: #{tpu_custom_call.1} parent=0 // pred_check_branch
    %8 = sbr.rel (0) target = $region5
  $region4: #{tpu_custom_call.1} parent=0 // pred_region
    _
  $region5: #{tpu_custom_call.1} parent=0 // pred_fallthru
    _
  // Predicated region
  $region6: #{tpu_custom_call.1} parent=0 // pred_check
    _
  $region7: #{tpu_custom_call.1} parent=0 // pred_check_branch
    %10 = sbr.rel (0) target = $region9
  $region8: #{tpu_custom_call.1} parent=0 // pred_region
    _
  $region9: #{tpu_custom_call.1} parent=0 // pred_fallthru
    _
  %v11 = vld [vmem:[%s0] sm:$0xff]
  %v12 = vld [vmem:[%s0 + $0x8] sm:$0xff]
  %v13 = vld [vmem:[%s0 + $0x10] sm:$0xff]
  %v14 = vld [vmem:[%s0 + $0x18] sm:$0xff]
  %v15 = vld [vmem:[%s0 + $0x20] sm:$0xff]
  %v16 = vld [vmem:[%s0 + $0x28] sm:$0xff]
  %v17 = vld [vmem:[%s0 + $0x30] sm:$0xff]
  %v18 = vld [vmem:[%s0 + $0x38] sm:$0xff]
  %v19 = vld [vmem:[%s0 + $0x40] sm:$0xff]
  %v20 = vld [vmem:[%s0 + $0x48] sm:$0xff]
  %v21 = vld [vmem:[%s0 + $0x50] sm:$0xff]
  %v22 = vld [vmem:[%s0 + $0x58] sm:$0xff]
  %v23 = vld [vmem:[%s0 + $0x60] sm:$0xff]
  %v24 = vld [vmem:[%s0 + $0x68] sm:$0xff]
  %v25 = vld [vmem:[%s0 + $0x70] sm:$0xff]
  %v26 = vld [vmem:[%s0 + $0x78] sm:$0xff]
  %v27 = vld [vmem:[%s1] sm:$0xf]
  %vm28 = vcmask 130048
  %v30 = vsel %vm28, %v27, 0
  %v33 = vsel %vm28, %v11, 0
  %v36 = vsel %vm28, %v12, 0
  %v39 = vsel %vm28, %v13, 0
  %v42 = vsel %vm28, %v14, 0
  %v45 = vsel %vm28, %v15, 0
  %v48 = vsel %vm28, %v16, 0
  %v51 = vsel %vm28, %v17, 0
  %v54 = vsel %vm28, %v18, 0
  %v57 = vsel %vm28, %v19, 0
  %v60 = vsel %vm28, %v20, 0
  %v63 = vsel %vm28, %v21, 0
  %v66 = vsel %vm28, %v22, 0
  %v69 = vsel %vm28, %v23, 0
  %v72 = vsel %vm28, %v24, 0
  %v75 = vsel %vm28, %v25, 0
  %v78 = vsel %vm28, %v26, 0
  %80 = vmatprep.subr.mxu0 0.0
  %81 = vmatpush1.xpose.msra.mxu0 %v33
  %82 = vmatprep.subr.mxu0 0.0
  %83 = vmatpush1.xpose.msra.mxu0 %v36
  %84 = vmatprep.subr.mxu0 0.0
  %85 = vmatpush1.xpose.msra.mxu0 %v39
  %86 = vmatprep.subr.mxu0 0.0
  %87 = vmatpush1.xpose.msra.mxu0 %v42
  %88 = vmatprep.subr.mxu0 0.0
  %89 = vmatpush1.xpose.msra.mxu0 %v45
  %90 = vmatprep.subr.mxu0 0.0
  %91 = vmatpush1.xpose.msra.mxu0 %v48
  %92 = vmatprep.subr.mxu0 0.0
  %93 = vmatpush1.xpose.msra.mxu0 %v51
  %94 = vmatprep.subr.mxu0 0.0
  %95 = vmatpush1.xpose.msra.mxu0 %v54
  %96 = vmatprep.subr.mxu0 0.0
  %97 = vmatpush1.xpose.msra.mxu0 %v57
  %98 = vmatprep.subr.mxu0 0.0
  %99 = vmatpush1.xpose.msra.mxu0 %v60
  %100 = vmatprep.subr.mxu0 0.0
  %101 = vmatpush1.xpose.msra.mxu0 %v63
  %102 = vmatprep.subr.mxu0 0.0
  %103 = vmatpush1.xpose.msra.mxu0 %v66
  %104 = vmatprep.subr.mxu0 0.0
  %105 = vmatpush1.xpose.msra.mxu0 %v69
  %106 = vmatprep.subr.mxu0 0.0
  %107 = vmatpush1.xpose.msra.mxu0 %v72
  %108 = vmatprep.subr.mxu0 0.0
  %109 = vmatpush1.xpose.msra.mxu0 %v75
  %110 = vmatprep.subr.mxu0 0.0
  %111 = vmatpush1.xpose.msra.mxu0 %v78
  %112 = vmatprep.subr.mxu0 0.0
  %113 = vmatpush1.xpose.msra.mxu0 0.0
  %114 = vmatprep.subr.mxu0 0.0
  %115 = vmatpush1.xpose.msra.mxu0 0.0
  %116 = vmatprep.subr.mxu0 0.0
  %117 = vmatpush1.xpose.msra.mxu0 0.0
  %118 = vmatprep.subr.mxu0 0.0
  %119 = vmatpush1.xpose.msra.mxu0 0.0
  %120 = vmatprep.subr.mxu0 0.0
  %121 = vmatpush1.xpose.msra.mxu0 0.0
  %122 = vmatprep.subr.mxu0 0.0
  %123 = vmatpush1.xpose.msra.mxu0 0.0
  %124 = vmatprep.subr.mxu0 0.0
  %125 = vmatpush1.xpose.msra.mxu0 0.0
  %126 = vmatprep.subr.mxu0 0.0
  %127 = vmatpush1.xpose.msra.mxu0 0.0
  %128 = vmatprep.subr.mxu0 0.0
  %129 = vmatpush1.xpose.msra.mxu0 0.0
  %130 = vmatprep.subr.mxu0 0.0
  %131 = vmatpush1.xpose.msra.mxu0 0.0
  %132 = vmatprep.subr.mxu0 0.0
  %133 = vmatpush1.xpose.msra.mxu0 0.0
  %134 = vmatprep.subr.mxu0 0.0
  %135 = vmatpush1.xpose.msra.mxu0 0.0
  %136 = vmatprep.subr.mxu0 0.0
  %137 = vmatpush1.xpose.msra.mxu0 0.0
  %138 = vmatprep.subr.mxu0 0.0
  %139 = vmatpush1.xpose.msra.mxu0 0.0
  %140 = vmatprep.subr.mxu0 0.0
  %141 = vmatpush1.xpose.msra.mxu0 0.0
  %142 = vmatprep.subr.mxu0 0.0
  %143 = vmatpush1.xpose.msra.mxu0 0.0
  %144 = vmatprep.mubr.f32.mxu0 0.0
  %145 = vmatmul.mubr.f32.gmra.mrb[0].mxu0 %v30
  %v146 = vpop.f32.mrb[0].mxu0
  %v147 = vadd.f32 0.0, %v146
  %v148 = vpop.f32.mrb[0].mxu0
  %149 = vdwg.mxu0
  %v150 = vld [vmem:[%s1 + $0x4] sm:$0xf]
  %vm151 = vcmask 1043456
  %v152 = vsel %vm151, %v147, 0.0
  %153 = vadd.xlane.f32.xlu0 %v152
  %v154 = vpop.xlane.xlu0 %153
  %v155 = vmul.f32 %v147, %v147
  %v156 = vsel %vm151, %v155, 0.0
  %157 = vadd.xlane.f32.xlu0 %v156
  %v158 = vpop.xlane.xlu0 %157
  %v159 = vmul.f32 %v154, 0.0078125
  %v160 = vmul.f32 %v158, 0.0078125
  %v161 = vmul.f32 %v159, %v159
  %v162 = vsub.f32 %v160, %v161
  %v163 = vadd.f32 %v162, 1e-05
  %v164 = vrsqrt.pop %v163
  %v165 = vmul.f32 %v150, %v164
  %v166 = vmul.f32 %v159, %v165
  %168 = vrot.lane.b32.xlu0 %v166, 1
  %v169 = vpop.permute.xlu0 %168
  %v171 = vsub.f32 %v150, %v169
  %173 = vset.pattern.permute.xlu0 0
  %174 = vperm.xlu0 %173, %v165
  %v175 = vpop.permute.xlu0 %174
  %v177 = vmul.f32 %v147, %v175
  %179 = vset.pattern.permute.xlu0 1
  %180 = vperm.xlu0 %179, %v171
  %v181 = vpop.permute.xlu0 %180
  %v183 = vadd.f32 %v177, %v181
  %v184 = vmul.f32 %v183, 0.2
  %v185 = vmax.f32 %v183, %v184
  %v186 = vld [vmem:[%s1 + $0x10] sm:$0xf]
  %v187 = vlaneseq
  %v188 = vshrl.u32 %v187, 7
  %v189 = vsub.s32 0, %v188
  %v190 = vrot.slane %v185, %v189
  %v191 = vmul.f32 %v186, %v190
  %v192 = vld [vmem:[%s1 + $0x14] sm:$0xf]
  %v193 = vlaneseq
  %v194 = vshrl.u32 %v193, 7
  %v195 = vsub.s32 1, %v194
  %v196 = vrot.slane %v185, %v195
  %v197 = vmul.f32 %v192, %v196
  %v198 = vadd.f32 %v191, %v197
  %v199 = vld [vmem:[%s1 + $0x18] sm:$0xf]
  %v200 = vlaneseq
  %v201 = vshrl.u32 %v200, 7
  %v202 = vsub.s32 2, %v201
  %v203 = vrot.slane %v185, %v202
  %v204 = vmul.f32 %v199, %v203
  %v205 = vadd.f32 %v198, %v204
  %v206 = vld [vmem:[%s1 + $0x1c] sm:$0xf]
  %v207 = vlaneseq
  %v208 = vshrl.u32 %v207, 7
  %v209 = vsub.s32 3, %v208
  %v210 = vrot.slane %v185, %v209
  %v211 = vmul.f32 %v206, %v210
  %v212 = vadd.f32 %v205, %v211
  %v213 = vld [vmem:[%s1 + $0x8] sm:$0xf]
  %v214 = vsel %vm151, %v212, 0.0
  %215 = vadd.xlane.f32.xlu0 %v214
  %v216 = vpop.xlane.xlu0 %215
  %v217 = vmul.f32 %v212, %v212
  %v218 = vsel %vm151, %v217, 0.0
  %219 = vadd.xlane.f32.xlu0 %v218
  %v220 = vpop.xlane.xlu0 %219
  %v221 = vmul.f32 %v216, 0.0078125
  %v222 = vmul.f32 %v220, 0.0078125
  %v223 = vmul.f32 %v221, %v221
  %v224 = vsub.f32 %v222, %v223
  %v225 = vadd.f32 %v224, 1e-05
  %v226 = vrsqrt.pop %v225
  %v227 = vmul.f32 %v213, %v226
  %v228 = vmul.f32 %v221, %v227
  %230 = vrot.lane.b32.xlu0 %v228, 1
  %v231 = vpop.permute.xlu0 %230
  %v233 = vsub.f32 %v213, %v231
  %235 = vset.pattern.permute.xlu0 0
  %236 = vperm.xlu0 %235, %v227
  %v237 = vpop.permute.xlu0 %236
  %v239 = vmul.f32 %v212, %v237
  %241 = vset.pattern.permute.xlu0 1
  %242 = vperm.xlu0 %241, %v233
  %v243 = vpop.permute.xlu0 %242
  %v245 = vadd.f32 %v239, %v243
  %v246 = vmul.f32 %v245, 0.2
  %v247 = vmax.f32 %v245, %v246
  %v248 = vld [vmem:[%s1 + $0x20] sm:$0xf]
  %v249 = vlaneseq
  %v250 = vshrl.u32 %v249, 7
  %v251 = vsub.s32 0, %v250
  %v252 = vrot.slane %v247, %v251
  %v253 = vmul.f32 %v248, %v252
  %v254 = vld [vmem:[%s1 + $0x24] sm:$0xf]
  %v255 = vlaneseq
  %v256 = vshrl.u32 %v255, 7
  %v257 = vsub.s32 1, %v256
  %v258 = vrot.slane %v247, %v257
  %v259 = vmul.f32 %v254, %v258
  %v260 = vadd.f32 %v253, %v259
  %v261 = vld [vmem:[%s1 + $0x28] sm:$0xf]
  %v262 = vlaneseq
  %v263 = vshrl.u32 %v262, 7
  %v264 = vsub.s32 2, %v263
  %v265 = vrot.slane %v247, %v264
  %v266 = vmul.f32 %v261, %v265
  %v267 = vadd.f32 %v260, %v266
  %v268 = vld [vmem:[%s1 + $0x2c] sm:$0xf]
  %v269 = vlaneseq
  %v270 = vshrl.u32 %v269, 7
  %v271 = vsub.s32 3, %v270
  %v272 = vrot.slane %v247, %v271
  %v273 = vmul.f32 %v268, %v272
  %v274 = vadd.f32 %v267, %v273
  %v275 = vld [vmem:[%s1 + $0xc] sm:$0xf]
  %v276 = vsel %vm151, %v274, 0.0
  %277 = vadd.xlane.f32.xlu0 %v276
  %v278 = vpop.xlane.xlu0 %277
  %v279 = vmul.f32 %v274, %v274
  %v280 = vsel %vm151, %v279, 0.0
  %281 = vadd.xlane.f32.xlu0 %v280
  %v282 = vpop.xlane.xlu0 %281
  %v283 = vmul.f32 %v278, 0.0078125
  %v284 = vmul.f32 %v282, 0.0078125
  %v285 = vmul.f32 %v283, %v283
  %v286 = vsub.f32 %v284, %v285
  %v287 = vadd.f32 %v286, 1e-05
  %v288 = vrsqrt.pop %v287
  %v289 = vmul.f32 %v275, %v288
  %v290 = vmul.f32 %v283, %v289
  %292 = vrot.lane.b32.xlu0 %v290, 1
  %v293 = vpop.permute.xlu0 %292
  %v295 = vsub.f32 %v275, %v293
  %297 = vset.pattern.permute.xlu0 0
  %298 = vperm.xlu0 %297, %v289
  %v299 = vpop.permute.xlu0 %298
  %v301 = vmul.f32 %v274, %v299
  %303 = vset.pattern.permute.xlu0 1
  %304 = vperm.xlu0 %303, %v295
  %v305 = vpop.permute.xlu0 %304
  %v307 = vadd.f32 %v301, %v305
  %v308 = vlaneseq
  %v309 = vshrl.u32 %v308, 7
  %v310 = vadd.s32 %v309, 8
  %v311 = vadd.s32 %v309, 16
  %v312 = vadd.s32 %v309, 24
  %v313 = vadd.s32 %v309, 32
  %v314 = vadd.s32 %v309, 40
  %v315 = vadd.s32 %v309, 48
  %v316 = vadd.s32 %v309, 56
  %v317 = vadd.s32 %v309, 64
  %v318 = vadd.s32 %v309, 72
  %v319 = vadd.s32 %v309, 80
  %v320 = vadd.s32 %v309, 88
  %v321 = vadd.s32 %v309, 96
  %v322 = vadd.s32 %v309, 104
  %v323 = vadd.s32 %v309, 112
  %v324 = vadd.s32 %v309, 120
  %v325 = vlaneseq
  %v326 = vand.u32 %v325, 127
  %vm327 = vcmp.eq.s32.totalorder %v309, %v326
  %vm328 = vcmp.eq.s32.totalorder %v310, %v326
  %vm329 = vcmp.eq.s32.totalorder %v311, %v326
  %vm330 = vcmp.eq.s32.totalorder %v312, %v326
  %vm331 = vcmp.eq.s32.totalorder %v313, %v326
  %vm332 = vcmp.eq.s32.totalorder %v314, %v326
  %vm333 = vcmp.eq.s32.totalorder %v315, %v326
  %vm334 = vcmp.eq.s32.totalorder %v316, %v326
  %vm335 = vcmp.eq.s32.totalorder %v317, %v326
  %vm336 = vcmp.eq.s32.totalorder %v318, %v326
  %vm337 = vcmp.eq.s32.totalorder %v319, %v326
  %vm338 = vcmp.eq.s32.totalorder %v320, %v326
  %vm339 = vcmp.eq.s32.totalorder %v321, %v326
  %vm340 = vcmp.eq.s32.totalorder %v322, %v326
  %vm341 = vcmp.eq.s32.totalorder %v323, %v326
  %vm342 = vcmp.eq.s32.totalorder %v324, %v326
  %v343 = vsel %vm327, 1.0, 0.0
  %v344 = vsel %vm328, 1.0, 0.0
  %v345 = vsel %vm329, 1.0, 0.0
  %v346 = vsel %vm330, 1.0, 0.0
  %v347 = vsel %vm331, 1.0, 0.0
  %v348 = vsel %vm332, 1.0, 0.0
  %v349 = vsel %vm333, 1.0, 0.0
  %v350 = vsel %vm334, 1.0, 0.0
  %v351 = vsel %vm335, 1.0, 0.0
  %v352 = vsel %vm336, 1.0, 0.0
  %v353 = vsel %vm337, 1.0, 0.0
  %v354 = vsel %vm338, 1.0, 0.0
  %v355 = vsel %vm339, 1.0, 0.0
  %v356 = vsel %vm340, 1.0, 0.0
  %v357 = vsel %vm341, 1.0, 0.0
  %v358 = vsel %vm342, 1.0, 0.0
  %359 = vmatprep.subr.mxu0 0.0
  %360 = vmatpush1.xpose.msra.mxu0 %v307
  %361 = vmatprep.subr.mxu0 0.0
  %362 = vmatpush1.xpose.msra.mxu0 0.0
  %363 = vmatprep.subr.mxu0 0.0
  %364 = vmatpush1.xpose.msra.mxu0 0.0
  %365 = vmatprep.subr.mxu0 0.0
  %366 = vmatpush1.xpose.msra.mxu0 0.0
  %367 = vmatprep.subr.mxu0 0.0
  %368 = vmatpush1.xpose.msra.mxu0 0.0
  %369 = vmatprep.subr.mxu0 0.0
  %370 = vmatpush1.xpose.msra.mxu0 0.0
  %371 = vmatprep.subr.mxu0 0.0
  %372 = vmatpush1.xpose.msra.mxu0 0.0
  %373 = vmatprep.subr.mxu0 0.0
  %374 = vmatpush1.xpose.msra.mxu0 0.0
  %375 = vmatprep.subr.mxu0 0.0
  %376 = vmatpush1.xpose.msra.mxu0 0.0
  %377 = vmatprep.subr.mxu0 0.0
  %378 = vmatpush1.xpose.msra.mxu0 0.0
  %379 = vmatprep.subr.mxu0 0.0
  %380 = vmatpush1.xpose.msra.mxu0 0.0
  %381 = vmatprep.subr.mxu0 0.0
  %382 = vmatpush1.xpose.msra.mxu0 0.0
  %383 = vmatprep.subr.mxu0 0.0
  %384 = vmatpush1.xpose.msra.mxu0 0.0
  %385 = vmatprep.subr.mxu0 0.0
  %386 = vmatpush1.xpose.msra.mxu0 0.0
  %387 = vmatprep.subr.mxu0 0.0
  %388 = vmatpush1.xpose.msra.mxu0 0.0
  %389 = vmatprep.subr.mxu0 0.0
  %390 = vmatpush1.xpose.msra.mxu0 0.0
  %391 = vmatprep.subr.mxu0 0.0
  %392 = vmatpush1.xpose.msra.mxu0 0.0
  %393 = vmatprep.subr.mxu0 0.0
  %394 = vmatpush1.xpose.msra.mxu0 0.0
  %395 = vmatprep.subr.mxu0 0.0
  %396 = vmatpush1.xpose.msra.mxu0 0.0
  %397 = vmatprep.subr.mxu0 0.0
  %398 = vmatpush1.xpose.msra.mxu0 0.0
  %399 = vmatprep.subr.mxu0 0.0
  %400 = vmatpush1.xpose.msra.mxu0 0.0
  %401 = vmatprep.subr.mxu0 0.0
  %402 = vmatpush1.xpose.msra.mxu0 0.0
  %403 = vmatprep.subr.mxu0 0.0
  %404 = vmatpush1.xpose.msra.mxu0 0.0
  %405 = vmatprep.subr.mxu0 0.0
  %406 = vmatpush1.xpose.msra.mxu0 0.0
  %407 = vmatprep.subr.mxu0 0.0
  %408 = vmatpush1.xpose.msra.mxu0 0.0
  %409 = vmatprep.subr.mxu0 0.0
  %410 = vmatpush1.xpose.msra.mxu0 0.0
  %411 = vmatprep.subr.mxu0 0.0
  %412 = vmatpush1.xpose.msra.mxu0 0.0
  %413 = vmatprep.subr.mxu0 0.0
  %414 = vmatpush1.xpose.msra.mxu0 0.0
  %415 = vmatprep.subr.mxu0 0.0
  %416 = vmatpush1.xpose.msra.mxu0 0.0
  %417 = vmatprep.subr.mxu0 0.0
  %418 = vmatpush1.xpose.msra.mxu0 0.0
  %419 = vmatprep.subr.mxu0 0.0
  %420 = vmatpush1.xpose.msra.mxu0 0.0
  %421 = vmatprep.subr.mxu0 0.0
  %422 = vmatpush1.xpose.msra.mxu0 0.0
  %423 = vmatprep.mubr.f32.mxu0 0.0
  %424 = vmatmul.mubr.f32.gmra.mrb[0].mxu0 %v343
  %v425 = vpop.f32.mrb[0].mxu0
  %v426 = vadd.f32 0.0, %v425
  %v427 = vpop.f32.mrb[0].mxu0
  %428 = vmatprep.mubr.f32.mxu0 0.0
  %429 = vmatmul.mubr.f32.gmra.mrb[0].mxu0 %v344
  %v430 = vpop.f32.mrb[0].mxu0
  %v431 = vadd.f32 0.0, %v430
  %v432 = vpop.f32.mrb[0].mxu0
  %433 = vmatprep.mubr.f32.mxu0 0.0
  %434 = vmatmul.mubr.f32.gmra.mrb[0].mxu0 %v345
  %v435 = vpop.f32.mrb[0].mxu0
  %v436 = vadd.f32 0.0, %v435
  %v437 = vpop.f32.mrb[0].mxu0
  %438 = vmatprep.mubr.f32.mxu0 0.0
  %439 = vmatmul.mubr.f32.gmra.mrb[0].mxu0 %v346
  %v440 = vpop.f32.mrb[0].mxu0
  %v441 = vadd.f32 0.0, %v440
  %v442 = vpop.f32.mrb[0].mxu0
  %443 = vmatprep.mubr.f32.mxu0 0.0
  %444 = vmatmul.mubr.f32.gmra.mrb[0].mxu0 %v347
  %v445 = vpop.f32.mrb[0].mxu0
  %v446 = vadd.f32 0.0, %v445
  %v447 = vpop.f32.mrb[0].mxu0
  %448 = vmatprep.mubr.f32.mxu0 0.0
  %449 = vmatmul.mubr.f32.gmra.mrb[0].mxu0 %v348
  %v450 = vpop.f32.mrb[0].mxu0
  %v451 = vadd.f32 0.0, %v450
  %v452 = vpop.f32.mrb[0].mxu0
  %453 = vmatprep.mubr.f32.mxu0 0.0
  %454 = vmatmul.mubr.f32.gmra.mrb[0].mxu0 %v349
  %v455 = vpop.f32.mrb[0].mxu0
  %v456 = vadd.f32 0.0, %v455
  %v457 = vpop.f32.mrb[0].mxu0
  %458 = vmatprep.mubr.f32.mxu0 0.0
  %459 = vmatmul.mubr.f32.gmra.mrb[0].mxu0 %v350
  %v460 = vpop.f32.mrb[0].mxu0
  %v461 = vadd.f32 0.0, %v460
  %v462 = vpop.f32.mrb[0].mxu0
  %463 = vmatprep.mubr.f32.mxu0 0.0
  %464 = vmatmul.mubr.f32.gmra.mrb[0].mxu0 %v351
  %v465 = vpop.f32.mrb[0].mxu0
  %v466 = vadd.f32 0.0, %v465
  %v467 = vpop.f32.mrb[0].mxu0
  %468 = vmatprep.mubr.f32.mxu0 0.0
  %469 = vmatmul.mubr.f32.gmra.mrb[0].mxu0 %v352
  %v470 = vpop.f32.mrb[0].mxu0
  %v471 = vadd.f32 0.0, %v470
  %v472 = vpop.f32.mrb[0].mxu0
  %473 = vmatprep.mubr.f32.mxu0 0.0
  %474 = vmatmul.mubr.f32.gmra.mrb[0].mxu0 %v353
  %v475 = vpop.f32.mrb[0].mxu0
  %v476 = vadd.f32 0.0, %v475
  %v477 = vpop.f32.mrb[0].mxu0
  %478 = vmatprep.mubr.f32.mxu0 0.0
  %479 = vmatmul.mubr.f32.gmra.mrb[0].mxu0 %v354
  %v480 = vpop.f32.mrb[0].mxu0
  %v481 = vadd.f32 0.0, %v480
  %v482 = vpop.f32.mrb[0].mxu0
  %483 = vmatprep.mubr.f32.mxu0 0.0
  %484 = vmatmul.mubr.f32.gmra.mrb[0].mxu0 %v355
  %v485 = vpop.f32.mrb[0].mxu0
  %v486 = vadd.f32 0.0, %v485
  %v487 = vpop.f32.mrb[0].mxu0
  %488 = vmatprep.mubr.f32.mxu0 0.0
  %489 = vmatmul.mubr.f32.gmra.mrb[0].mxu0 %v356
  %v490 = vpop.f32.mrb[0].mxu0
  %v491 = vadd.f32 0.0, %v490
  %v492 = vpop.f32.mrb[0].mxu0
  %493 = vmatprep.mubr.f32.mxu0 0.0
  %494 = vmatmul.mubr.f32.gmra.mrb[0].mxu0 %v357
  %v495 = vpop.f32.mrb[0].mxu0
  %v496 = vadd.f32 0.0, %v495
  %v497 = vpop.f32.mrb[0].mxu0
  %498 = vmatprep.mubr.f32.mxu0 0.0
  %499 = vmatmul.mubr.f32.gmra.mrb[0].mxu0 %v358
  %v500 = vpop.f32.mrb[0].mxu0
  %v501 = vadd.f32 0.0, %v500
  %v502 = vpop.f32.mrb[0].mxu0
  %503 = vdwg.mxu0
  %vm504 = vcmask 31744
  %505 = vst.msk [vmem:[%s2] sm:$0xff] %vm504, %v426
  %506 = vst.msk [vmem:[%s2 + $0x8] sm:$0xff] %vm504, %v431
  %507 = vst.msk [vmem:[%s2 + $0x10] sm:$0xff] %vm504, %v436
  %508 = vst.msk [vmem:[%s2 + $0x18] sm:$0xff] %vm504, %v441
  %509 = vst.msk [vmem:[%s2 + $0x20] sm:$0xff] %vm504, %v446
  %510 = vst.msk [vmem:[%s2 + $0x28] sm:$0xff] %vm504, %v451
  %511 = vst.msk [vmem:[%s2 + $0x30] sm:$0xff] %vm504, %v456
  %512 = vst.msk [vmem:[%s2 + $0x38] sm:$0xff] %vm504, %v461
  %513 = vst.msk [vmem:[%s2 + $0x40] sm:$0xff] %vm504, %v466
  %514 = vst.msk [vmem:[%s2 + $0x48] sm:$0xff] %vm504, %v471
  %515 = vst.msk [vmem:[%s2 + $0x50] sm:$0xff] %vm504, %v476
  %516 = vst.msk [vmem:[%s2 + $0x58] sm:$0xff] %vm504, %v481
  %517 = vst.msk [vmem:[%s2 + $0x60] sm:$0xff] %vm504, %v486
  %518 = vst.msk [vmem:[%s2 + $0x68] sm:$0xff] %vm504, %v491
  %519 = vst.msk [vmem:[%s2 + $0x70] sm:$0xff] %vm504, %v496
  %520 = vst.msk [vmem:[%s2 + $0x78] sm:$0xff] %vm504, %v501
  // Predicated region
  $region10: #{tpu_custom_call.1} parent=0 // pred_check
    _
  $region11: #{tpu_custom_call.1} parent=0 // pred_check_branch
    %522 = sbr.rel (0) target = $region13
  $region12: #{tpu_custom_call.1} parent=0 // pred_region
    _
  $region13: #{tpu_custom_call.1} parent=0 // pred_fallthru
    _
  // Predicated region
  $region14: #{tpu_custom_call.1} parent=0 // pred_check
    _
  $region15: #{tpu_custom_call.1} parent=0 // pred_check_branch
    %524 = sbr.rel (0) target = $region17
  $region16: #{tpu_custom_call.1} parent=0 // pred_region
    _
  $region17: #{tpu_custom_call.1} parent=0 // pred_fallthru
    _

</llo_original>
